<compile_context>
chip_gen: v6e
topology: v6e:2x2x1
jax: 0.10.0
libtpu: 0.0.40
codegen_flags: <defaults>
</compile_context>

<pallas_src>
import functools

import jax
import jax.numpy as jnp
from jax.experimental import pallas as pl
from jax.experimental.pallas import tpu as pltpu


# ---------------------------------------------------------------------------
# Kernels
# ---------------------------------------------------------------------------
def _matmul_bias_kernel_acc(x_ref, w_ref, b_ref, o_ref, acc_ref):
    # x_ref: (tm, tk) bf16   w_ref: (tk, tn) bf16   b_ref: (1, tn) f32
    # o_ref: (tm, tn)        acc_ref: (tm, tn) f32 scratch (for non-f32 outputs)
    k = pl.program_id(2)

    @pl.when(k == 0)
    def _init():
        acc_ref[...] = jnp.zeros_like(acc_ref)

    acc_ref[...] += jnp.dot(
        x_ref[...], w_ref[...], preferred_element_type=jnp.float32
    )

    @pl.when(k == pl.num_programs(2) - 1)
    def _finalize():
        o_ref[...] = (acc_ref[...] + b_ref[...]).astype(o_ref.dtype)


def _matmul_bias_kernel_f32out(x_ref, w_ref, b_ref, o_ref):
    # f32 output: accumulate directly into the resident output block (no scratch).
    k = pl.program_id(2)

    @pl.when(k == 0)
    def _init():
        o_ref[...] = jnp.zeros_like(o_ref)

    o_ref[...] += jnp.dot(
        x_ref[...], w_ref[...], preferred_element_type=jnp.float32
    )

    @pl.when(k == pl.num_programs(2) - 1)
    def _finalize():
        o_ref[...] += b_ref[...]


# ---------------------------------------------------------------------------
# Helpers
# ---------------------------------------------------------------------------
def _round_up(a: int, b: int) -> int:
    return (a + b - 1) // b * b


def _sublane_multiple(dtype) -> int:
    # 8 rows per vreg sublane group for 32-bit, 16 for bf16, 32 for int8/fp8.
    return max(8, 32 // jnp.dtype(dtype).itemsize)


def prepare_post_layer_params(weight, bias, *, tn=512, tk=1024,
                              compute_dtype=jnp.bfloat16):
    """Pad + transpose + cast nn.Linear params ONCE, outside the hot path.

    weight: (out_dim, in_dim) PyTorch layout; bias: (out_dim,).
    Returns (w_p, b_p) with w_p: (Kp, Np) compute_dtype, b_p: (1, Np) f32.
    Use the same tn/tk defaults when calling post_layer.
    """
    N, K = weight.shape
    Kp = _round_up(K, 128)
    Np = _round_up(N, 128)
    tk = min(tk, Kp)
    tn = min(tn, Np)
    Kp = _round_up(Kp, tk)
    Np = _round_up(Np, tn)
    w_p = jnp.pad(weight, ((0, Np - N), (0, Kp - K))).T.astype(compute_dtype)
    b_p = jnp.pad(bias, (0, Np - N)).reshape(1, Np).astype(jnp.float32)
    return w_p, b_p


# ---------------------------------------------------------------------------
# Forward
# ---------------------------------------------------------------------------
@functools.partial(jax.jit, static_argnames=("out_dim", "tm", "tn", "tk"))
def post_layer(x, w_p, b_p, *, out_dim, tm=512, tn=512, tk=1024):
    """PostLayer forward: (B, S, in_dim) -> (B, S, out_dim).

    w_p/b_p come from prepare_post_layer_params (padded, transposed, bf16).
    """
    B, S, K = x.shape
    Kp, Np = w_p.shape
    M = B * S

    compute_dtype = w_p.dtype
    out_dtype = x.dtype
    sub = _sublane_multiple(compute_dtype)

    # Padded extents / clamped tiles (lane dims multiples of 128, sublane dims
    # multiples of the compute dtype's packed-row count).
    Mp = _round_up(M, sub)
    tm = min(tm, Mp)
    tk = min(tk, Kp)
    tn = min(tn, Np)
    Mp = _round_up(Mp, tm)
    assert Kp % tk == 0 and Np % tn == 0, "weights not padded for these tiles"

    # Megacore (v7x has 2 TCs): make sure a 'parallel' grid axis has extent >= 2
    # when the problem is big enough to split cheaply.
    if Mp // tm == 1 and Np // tn == 1:
        if tm >= 256 and (tm // 2) % sub == 0:
            tm //= 2
        elif tn >= 256 and (tn // 2) % 128 == 0:
            tn //= 2

    # Activations: flatten, cast to the MXU-native dtype, pad.
    x_p = jnp.pad(x.reshape(M, K).astype(compute_dtype),
                  ((0, Mp - M), (0, Kp - K)))

    grid = (Mp // tm, Np // tn, Kp // tk)

    # f32 output -> accumulate straight into the resident output block.
    if jnp.dtype(out_dtype) == jnp.dtype(jnp.float32):
        kernel = _matmul_bias_kernel_f32out
        scratch_shapes = []
    else:
        kernel = _matmul_bias_kernel_acc
        scratch_shapes = [pltpu.VMEM((tm, tn), jnp.float32)]

    in_bytes = jnp.dtype(compute_dtype).itemsize
    out_bytes = jnp.dtype(out_dtype).itemsize
    cost = pl.CostEstimate(
        flops=2 * Mp * Kp * Np,
        transcendentals=0,
        bytes_accessed=(
            (Np // tn) * Mp * Kp * in_bytes      # x re-read per N-tile column
            + (Mp // tm) * Kp * Np * in_bytes    # W re-read per M-tile row
            + Mp * Np * out_bytes                # output writeback
            + (Mp // tm) * Np * 4                # bias reloads
        ),
    )

    out_p = pl.pallas_call(
        kernel,
        out_shape=jax.ShapeDtypeStruct((Mp, Np), out_dtype),
        grid_spec=pltpu.PrefetchScalarGridSpec(
            num_scalar_prefetch=0,
            grid=grid,
            in_specs=[
                pl.BlockSpec((tm, tk), lambda i, j, k: (i, k)),  # x tile
                pl.BlockSpec((tk, tn), lambda i, j, k: (k, j)),  # W tile (K, N)
                pl.BlockSpec((1, tn), lambda i, j, k: (0, j)),   # bias tile
            ],
            out_specs=pl.BlockSpec((tm, tn), lambda i, j, k: (i, j)),
            scratch_shapes=scratch_shapes,
        ),
        compiler_params=pltpu.CompilerParams(
            # M/N parallel (megacore-shardable), K reduction arbitrary.
            dimension_semantics=("parallel", "parallel", "arbitrary"),
            # Headroom for double-buffered 512x1024 bf16 tiles; safe on
            # v5e/v6e (128 MiB physical) and v7x (64 MiB per TC).
            vmem_limit_bytes=48 * 1024 * 1024,
        ),
        cost_estimate=cost,
    )(x_p, w_p, b_p)

    return out_p[:M, :out_dim].reshape(B, S, out_dim)


# ---------------------------------------------------------------------------
# Self-test
# ---------------------------------------------------------------------------
if __name__ == "__main__":
    # Small shapes consistent with PostLayer.forward: (B, S, in_dim) -> (B, S, out_dim)
    B, S, in_dim, out_dim = 2, 8, 64, 32

    key = jax.random.PRNGKey(0)
    kx, kw, kb = jax.random.split(key, 3)

    x = jax.random.normal(kx, (B, S, in_dim), dtype=jnp.float32)
    # PyTorch nn.Linear weight layout: (out_dim, in_dim)
    weight = jax.random.normal(kw, (out_dim, in_dim), dtype=jnp.float32) * 0.02
    bias = jax.random.normal(kb, (out_dim,), dtype=jnp.float32) * 0.02

    # Weight prep happens once (padded, transposed to (K, N), bf16).
    w_p, b_p = prepare_post_layer_params(weight, bias)

    out = post_layer(x, w_p, b_p, out_dim=out_dim)
    jax.block_until_ready(out)

    # Reference with the same bf16 operand quantization (f32 accumulation).
    x_q = x.astype(jnp.bfloat16).astype(jnp.float32)
    w_q = weight.astype(jnp.bfloat16).astype(jnp.float32)
    ref = jnp.einsum("bsi,oi->bso", x_q, w_q) + bias

    assert out.shape == (B, S, out_dim)
    assert jnp.allclose(out, ref, atol=2e-3, rtol=2e-3), "mismatch vs reference"
    # Sanity vs full-precision reference as well (looser, bf16 operands).
    ref_f32 = jnp.einsum("bsi,oi->bso", x, weight) + bias
    assert jnp.allclose(out, ref_f32, atol=5e-2, rtol=5e-2)

    print("KERNEL_OK")
</pallas_src>

<mosaic_0001>
module attributes {stable_mosaic.version = 11 : i64} {
  func.func @_matmul_bias_kernel_f32out(%arg0: i32, %arg1: i32, %arg2: i32, %arg3: memref<16x128xbf16, #tpu.memory_space<vmem>>, %arg4: memref<128x128xbf16, #tpu.memory_space<vmem>>, %arg5: memref<1x128xf32, #tpu.memory_space<vmem>>, %arg6: memref<16x128xf32, #tpu.memory_space<vmem>>) attributes {dimension_semantics = [#tpu.dimension_semantics<parallel>, #tpu.dimension_semantics<parallel>, #tpu.dimension_semantics<arbitrary>], iteration_bounds = array<i64: 1, 1, 1>, scalar_prefetch = 0 : i64, scratch_operands = 0 : i64, tpu.core_type = #tpu.core_type<tc>, window_params = [{transform_indices = @transform_0, window_bounds = array<i64: 16, 128>}, {transform_indices = @transform_1, window_bounds = array<i64: 128, 128>}, {transform_indices = @transform_2, window_bounds = array<i64: 1, 128>}, {transform_indices = @transform_3, window_bounds = array<i64: 16, 128>}]} {
    %c0_i32 = arith.constant 0 : i32
    %0 = arith.cmpi eq, %arg2, %c0_i32 : i32
    %1 = arith.extui %0 : i1 to i32
    %c0_i32_0 = arith.constant 0 : i32
    %2 = arith.cmpi ne, %1, %c0_i32_0 : i32
    scf.if %2 {
      %cst_10 = arith.constant 0.000000e+00 : f32
      %12 = vector.broadcast %cst_10 : f32 to vector<16x128xf32>
      %c0_11 = arith.constant 0 : index
      %c0_12 = arith.constant 0 : index
      %13 = vector.load %arg6[%c0_11, %c0_12] : memref<16x128xf32, #tpu.memory_space<vmem>>, vector<16x128xf32>
      tpu.vector_store %arg6[%c0_11, %c0_12], %12 {strides = array<i32>} : memref<16x128xf32, #tpu.memory_space<vmem>>, vector<16x128xf32>,
    } else {
    }
    %c0 = arith.constant 0 : index
    %c0_1 = arith.constant 0 : index
    %3 = vector.load %arg6[%c0, %c0_1] : memref<16x128xf32, #tpu.memory_space<vmem>>, vector<16x128xf32>
    %c0_2 = arith.constant 0 : index
    %c0_3 = arith.constant 0 : index
    %4 = vector.load %arg3[%c0_2, %c0_3] : memref<16x128xbf16, #tpu.memory_space<vmem>>, vector<16x128xbf16>
    %c0_4 = arith.constant 0 : index
    %c0_5 = arith.constant 0 : index
    %5 = vector.load %arg4[%c0_4, %c0_5] : memref<128x128xbf16, #tpu.memory_space<vmem>>, vector<128x128xbf16>
    %cst = arith.constant dense<0.000000e+00> : vector<16x128xf32>
    %6 = tpu.matmul %4, %5, %cst {dimension_numbers = #tpu.dot_dimension_numbers<[1], [0], [0], [1], [0, 0, 1, 1], [], []>} : vector<16x128xbf16>, vector<128x128xbf16>, vector<16x128xf32> -> vector<16x128xf32>
    %7 = arith.addf %3, %6 : vector<16x128xf32>
    %c0_6 = arith.constant 0 : index
    %c0_7 = arith.constant 0 : index
    %8 = vector.load %arg6[%c0_6, %c0_7] : memref<16x128xf32, #tpu.memory_space<vmem>>, vector<16x128xf32>
    tpu.vector_store %arg6[%c0_6, %c0_7], %7 {strides = array<i32>} : memref<16x128xf32, #tpu.memory_space<vmem>>, vector<16x128xf32>,
    %c0_i32_8 = arith.constant 0 : i32
    %9 = arith.cmpi eq, %arg2, %c0_i32_8 : i32
    %10 = arith.extui %9 : i1 to i32
    %c0_i32_9 = arith.constant 0 : i32
    %11 = arith.cmpi ne, %10, %c0_i32_9 : i32
    scf.if %11 {
      %c0_10 = arith.constant 0 : index
      %c0_11 = arith.constant 0 : index
      %12 = vector.load %arg6[%c0_10, %c0_11] : memref<16x128xf32, #tpu.memory_space<vmem>>, vector<16x128xf32>
      %c0_12 = arith.constant 0 : index
      %c0_13 = arith.constant 0 : index
      %13 = vector.load %arg5[%c0_12, %c0_13] : memref<1x128xf32, #tpu.memory_space<vmem>>, vector<1x128xf32>
      %14 = vector.broadcast %13 : vector<1x128xf32> to vector<16x128xf32>
      %15 = arith.addf %12, %14 : vector<16x128xf32>
      %c0_14 = arith.constant 0 : index
      %c0_15 = arith.constant 0 : index
      %16 = vector.load %arg6[%c0_14, %c0_15] : memref<16x128xf32, #tpu.memory_space<vmem>>, vector<16x128xf32>
      tpu.vector_store %arg6[%c0_14, %c0_15], %15 {strides = array<i32>} : memref<16x128xf32, #tpu.memory_space<vmem>>, vector<16x128xf32>,
    } else {
    }
    return
  }
  func.func @transform_0(%arg0: i32, %arg1: i32, %arg2: i32) -> (i32, i32) {
    %c0_i32 = arith.constant 0 : i32
    return %arg0, %arg2 : i32, i32
  }
  func.func @transform_1(%arg0: i32, %arg1: i32, %arg2: i32) -> (i32, i32) {
    %c0_i32 = arith.constant 0 : i32
    return %arg2, %arg1 : i32, i32
  }
  func.func @transform_2(%arg0: i32, %arg1: i32, %arg2: i32) -> (i32, i32) {
    %c0_i32 = arith.constant 0 : i32
    %c0_i32_0 = arith.constant 0 : i32
    return %c0_i32, %arg1 : i32, i32
  }
  func.func @transform_3(%arg0: i32, %arg1: i32, %arg2: i32) -> (i32, i32) {
    %c0_i32 = arith.constant 0 : i32
    return %arg0, %arg1 : i32, i32
  }
}

</mosaic_0001>

<llo_original>
// kernel: post_layer.1
$region0: #{post_layer.1}
  #allocation0 [shape = 'u32[]', space=smem, size = 0x4, offset = 0x4, fixed_abs, tag = 'smem constant byte address 0x4 - core index']
  #allocation1 [shape = 'u32[144,128]{1,0:T(1,128)}', space=vmem, size = 0x12000, scoped, tag = 'internal scratch']
  %s0 = inlined_call_operand.vmem [shape: bf16[16,128], index: 0, kind: input, shape index: {}]
  %s1 = inlined_call_operand.hbm [shape: bf16[128,128], index: 1, kind: input, shape index: {}]
  %s2 = inlined_call_operand.vmem [shape: f32[1,128], index: 2, kind: input, shape index: {}]
  %s3 = inlined_call_operand.vmem [shape: f32[16,128], index: 3, kind: output, shape index: {}]
  %s4 = sld [smem:[#allocation0]]
  $region34: #{post_layer.1} parent=0
    _
  %s6 = ssub.s32 1, %s4
  %s7 = scalar_select 0, %s6, %s4
  $region1: #{post_layer.1} parent=0
    #allocation2 [shape = 'u8[32768]{0}', space=vmem, size = 0x8000, scoped, tag = 'input window, operand 1, single buffered']
    #allocation3 [shape = 's32[1]{0}', space=sflag, size = 0x4, scoped, tag = 'scoped memory for post_layer.1']
    %8 = vsyncpa [#allocation3], 0
    // Predicated region
    $region2: #{post_layer.1} parent=1 // pred_check
      _
    $region3: #{post_layer.1} parent=1 // pred_check_branch
      %10 = sbr.rel (0) target = $region5
    $region4: #{post_layer.1} parent=1 // pred_region
      _
    $region5: #{post_layer.1} parent=1 // pred_fallthru
      _
    // Predicated region
    $region6: #{post_layer.1} parent=1 // pred_check
      _
    $region7: #{post_layer.1} parent=1 // pred_check_branch
      %12 = sbr.rel (0) target = $region9
    $region8: #{post_layer.1} parent=1 // pred_region
      %s14 = ssub.s32 1024, 1024
      %15 = vsyncadd [#allocation3], %s14
      %s16 = sshll.u32 [#allocation2], 4
      %s17 = int_to_ptr.vmem [resolvable:$true] %s16
      %22 = dma.hbm_to_vmem [thread:$0]  %s1, 1024, %s17, [#allocation3], 64, 64, 4
    $region9: #{post_layer.1} parent=1 // pred_fallthru
      _
    // Predicated region
    $region10: #{post_layer.1} parent=1 // pred_check
      _
    $region11: #{post_layer.1} parent=1 // pred_check_branch
      %24 = sbr.rel (0) target = $region13
    $region12: #{post_layer.1} parent=1 // pred_region
      _
    $region13: #{post_layer.1} parent=1 // pred_fallthru
      _
    // Predicated region
    $region14: #{post_layer.1} parent=1 // pred_check
      _
    $region15: #{post_layer.1} parent=1 // pred_check_branch
      %26 = sbr.rel (0) target = $region17
    $region16: #{post_layer.1} parent=1 // pred_region
      %27 = dma.done [#allocation3], 1024
    $region17: #{post_layer.1} parent=1 // pred_fallthru
      _
    %p29 = scmp.eq.s32.totalorder 0, 0
    // Predicated region
    $region18: #{post_layer.1} parent=1 // pred_check
      %p30 = pneg %p29
    $region19: #{post_layer.1} parent=1 // pred_check_branch
      %32 = sbr.rel (%p30) target = $region21
    $region20: #{post_layer.1} parent=1 // pred_region
      %33 = vst [vmem:[%s3] sm:$0xff] 0.0
      %34 = vst [vmem:[%s3 + $0x8] sm:$0xff] 0.0
    $region21: #{post_layer.1} parent=1 // pred_fallthru
      _
    %v35 = vld [vmem:[%s3] sm:$0xff]
    %v36 = vld [vmem:[%s3 + $0x8] sm:$0xff]
    %v37 = vld [vmem:[%s0] sm:$0xf]
    %v38 = vld [vmem:[%s0 + $0x4] sm:$0xf]
    %v39 = vld [vmem:[#allocation2] sm:$0xf]
    %v40 = vld [vmem:[#allocation2 + $0x4] sm:$0xf]
    %v41 = vld [vmem:[#allocation2 + $0x8] sm:$0xf]
    %v42 = vld [vmem:[#allocation2 + $0xc] sm:$0xf]
    %v43 = vld [vmem:[#allocation2 + $0x10] sm:$0xf]
    %v44 = vld [vmem:[#allocation2 + $0x14] sm:$0xf]
    %v45 = vld [vmem:[#allocation2 + $0x18] sm:$0xf]
    %v46 = vld [vmem:[#allocation2 + $0x1c] sm:$0xf]
    %v47 = vld [vmem:[#allocation2 + $0x20] sm:$0xf]
    %v48 = vld [vmem:[#allocation2 + $0x24] sm:$0xf]
    %v49 = vld [vmem:[#allocation2 + $0x28] sm:$0xf]
    %v50 = vld [vmem:[#allocation2 + $0x2c] sm:$0xf]
    %v51 = vld [vmem:[#allocation2 + $0x30] sm:$0xf]
    %v52 = vld [vmem:[#allocation2 + $0x34] sm:$0xf]
    %v53 = vld [vmem:[#allocation2 + $0x38] sm:$0xf]
    %v54 = vld [vmem:[#allocation2 + $0x3c] sm:$0xf]
    %v57 = vunpack.c.l.b16 %v37
    %v58 = vunpack.c.l.b16 %v38
    %v59 = vpack.c.b16 %v58, %v57
    %v77 = vunpack.c.l.b16 %v39
    %v78 = vunpack.c.l.b16 %v40
    %v79 = vunpack.c.l.b16 %v41
    %v80 = vunpack.c.l.b16 %v42
    %v81 = vunpack.c.l.b16 %v43
    %v82 = vunpack.c.l.b16 %v44
    %v83 = vunpack.c.l.b16 %v45
    %v84 = vunpack.c.l.b16 %v46
    %v85 = vunpack.c.l.b16 %v47
    %v86 = vunpack.c.l.b16 %v48
    %v87 = vunpack.c.l.b16 %v49
    %v88 = vunpack.c.l.b16 %v50
    %v89 = vunpack.c.l.b16 %v51
    %v90 = vunpack.c.l.b16 %v52
    %v91 = vunpack.c.l.b16 %v53
    %v92 = vunpack.c.l.b16 %v54
    %v93 = vpack.c.b16 %v78, %v77
    %v94 = vpack.c.b16 %v80, %v79
    %v95 = vpack.c.b16 %v82, %v81
    %v96 = vpack.c.b16 %v84, %v83
    %v97 = vpack.c.b16 %v86, %v85
    %v98 = vpack.c.b16 %v88, %v87
    %v99 = vpack.c.b16 %v90, %v89
    %v100 = vpack.c.b16 %v92, %v91
    %109 = vmatprep.subr.bf16.mxu0 0
    %110 = vmatpush1.bf16.msra.mxu0 %v100
    %111 = vmatprep.subr.bf16.mxu0 0
    %112 = vmatpush1.bf16.msra.mxu0 %v99
    %113 = vmatprep.subr.bf16.mxu0 0
    %114 = vmatpush1.bf16.msra.mxu0 %v98
    %115 = vmatprep.subr.bf16.mxu0 0
    %116 = vmatpush1.bf16.msra.mxu0 %v97
    %117 = vmatprep.subr.bf16.mxu0 0
    %118 = vmatpush1.bf16.msra.mxu0 %v96
    %119 = vmatprep.subr.bf16.mxu0 0
    %120 = vmatpush1.bf16.msra.mxu0 %v95
    %121 = vmatprep.subr.bf16.mxu0 0
    %122 = vmatpush1.bf16.msra.mxu0 %v94
    %123 = vmatprep.subr.bf16.mxu0 0
    %124 = vmatpush1.bf16.msra.mxu0 %v93
    %125 = vmatprep.subr.bf16.mxu0 0
    %126 = vmatpush2.bf16.msra.mxu0 0
    %127 = vmatprep.subr.bf16.mxu0 0
    %128 = vmatpush2.bf16.msra.mxu0 0
    %129 = vmatprep.subr.bf16.mxu0 0
    %130 = vmatpush2.bf16.msra.mxu0 0
    %131 = vmatprep.subr.bf16.mxu0 0
    %132 = vmatpush2.bf16.msra.mxu0 0
    %133 = vmatprep.subr.bf16.mxu0 0
    %134 = vmatpush2.bf16.msra.mxu0 0
    %135 = vmatprep.subr.bf16.mxu0 0
    %136 = vmatpush2.bf16.msra.mxu0 0
    %137 = vmatprep.subr.bf16.mxu0 0
    %138 = vmatpush2.bf16.msra.mxu0 0
    %139 = vmatprep.subr.bf16.mxu0 0
    %140 = vmatpush2.bf16.msra.mxu0 0
    %141 = vmatprep.mubr.bf16.mxu0 0
    %142 = vmatmul.mubr.bf16.gmra.mxu0 %v59
    %v143 = vpop.f32.mrf.mxu0
    %v144 = vadd.f32 0.0, %v143
    %v145 = vpop.f32.mrf.mxu0
    %v146 = vpop.f32.mrf.mxu0
    %v147 = vadd.f32 0.0, %v146
    %v148 = vpop.f32.mrf.mxu0
    %149 = vdwg.mxu0
    %v150 = vadd.f32 %v35, %v144
    %v151 = vadd.f32 %v36, %v147
    %152 = vst [vmem:[%s3] sm:$0xff] %v150
    %153 = vst [vmem:[%s3 + $0x8] sm:$0xff] %v151
    // Predicated region
    $region22: #{post_layer.1} parent=1 // pred_check
      %p154 = pneg %p29
    $region23: #{post_layer.1} parent=1 // pred_check_branch
      %156 = sbr.rel (%p154) target = $region25
    $region24: #{post_layer.1} parent=1 // pred_region
      %v157 = vld [vmem:[%s3] sm:$0xff]
      %v158 = vld [vmem:[%s3 + $0x8] sm:$0xff]
      %v159 = vld [vmem:[%s2] sm:$0x1]
      %v161 = vlaneseq
      %v162 = vshrl.u32 %v161, 7
      %v163 = vsub.s32 0, %v162
      %v164 = vrot.slane %v159, %v163
      %v166 = vadd.f32 %v157, %v164
      %v167 = vadd.f32 %v158, %v164
      %168 = vst [vmem:[%s3] sm:$0xff] %v166
      %169 = vst [vmem:[%s3 + $0x8] sm:$0xff] %v167
    $region25: #{post_layer.1} parent=1 // pred_fallthru
      _
    // Predicated region
    $region26: #{post_layer.1} parent=1 // pred_check
      _
    $region27: #{post_layer.1} parent=1 // pred_check_branch
      %171 = sbr.rel (0) target = $region29
    $region28: #{post_layer.1} parent=1 // pred_region
      _
    $region29: #{post_layer.1} parent=1 // pred_fallthru
      _
    // Predicated region
    $region30: #{post_layer.1} parent=1 // pred_check
      _
    $region31: #{post_layer.1} parent=1 // pred_check_branch
      %173 = sbr.rel (0) target = $region33
    $region32: #{post_layer.1} parent=1 // pred_region
      _
    $region33: #{post_layer.1} parent=1 // pred_fallthru
      _
    %174 = vsyncpa [#allocation3], 1

</llo_original>
